<compile_context>
chip_gen: v7x
topology: tpu7x:2x2x1
jax: 0.10.0
libtpu: 0.0.40
codegen_flags: <defaults>
</compile_context>

<pallas_src>
import functools

import jax
import jax.numpy as jnp
from jax.experimental import pallas as pl
from jax.experimental.pallas import tpu as pltpu


def _round_up(v, mult):
    return ((v + mult - 1) // mult) * mult


def _ffn_kernel(x_ref, w1t_ref, w3t_ref, w2t_ref, o_ref, acc_ref, *, gate_dtype):
    """One (tm, D) token tile x one th-chunk of the hidden dimension.

    x_ref   : (TM, D)  activation tile (original dtype; cast to bf16 here)
    w1t_ref : (D, TH)  gate-projection weight chunk (bf16)
    w3t_ref : (D, TH)  up-projection weight chunk   (bf16)
    w2t_ref : (TH, D)  down-projection weight chunk (bf16)
    o_ref   : (TM, D)  output tile (original dtype)
    acc_ref : (TM, D)  f32 accumulator scratch, resident across the hidden axis
    """
    k = pl.program_id(1)

    @pl.when(k == 0)
    def _init():
        acc_ref[...] = jnp.zeros_like(acc_ref)

    # In-kernel activation cast (saves a separate wrapper-side HBM pass).
    x = x_ref[...].astype(w1t_ref.dtype)

    # Gate / up projections for this hidden chunk: bf16 MXU, f32 accumulation.
    h1 = jnp.dot(x, w1t_ref[...], preferred_element_type=jnp.float32)   # (TM, TH)
    h3 = jnp.dot(x, w3t_ref[...], preferred_element_type=jnp.float32)   # (TM, TH)

    # SwiGLU gating: bf16 on v6e/v7x (bf16 VPU/EUP), f32 on v5e.
    h1g = h1.astype(gate_dtype)
    h3g = h3.astype(gate_dtype)
    gated = (h1g * jax.nn.sigmoid(h1g)) * h3g

    # Down projection of this chunk, accumulated over hidden chunks.
    acc_ref[...] += jnp.dot(gated.astype(w2t_ref.dtype), w2t_ref[...],
                            preferred_element_type=jnp.float32)

    @pl.when(k == pl.num_programs(1) - 1)
    def _finalize():
        # Dropout p = 0.0 -> identity.
        # TODO(synk): training-mode dropout (p > 0) would build the keep mask
        #             in-kernel with pltpu.prng_seed / pltpu.prng_random_bits.
        o_ref[...] = acc_ref[...].astype(o_ref.dtype)


def prepare_ffn_weights(w1, w2, w3, compute_dtype=jnp.bfloat16):
    """One-time weight prep (do at init time, NOT per forward call).

    PyTorch nn.Linear layout: w1, w3: (hidden, dim); w2: (dim, hidden).
    Returns (w1t, w3t, w2t) = (w1^T, w3^T, w2^T), cast to `compute_dtype`.
    Gate/up weights stay separate so hidden-dim streaming keeps matching columns.
    """
    hidden, dim = w1.shape
    assert w3.shape == (hidden, dim) and w2.shape == (dim, hidden)
    return (w1.T.astype(compute_dtype),
            w3.T.astype(compute_dtype),
            w2.T.astype(compute_dtype))


def _default_gate_dtype():
    """bf16 gating where the VPU/EUP support it (v6e/v7x), f32 otherwise (v5e-)."""
    try:
        kind = jax.devices()[0].device_kind.lower()
    except Exception:
        kind = ""
    for old in ("v2", "v3", "v4", "v5"):
        if old in kind:
            return jnp.float32
    return jnp.bfloat16


def _vmem_budget_bytes():
    """Generation-aware VMEM budget: capacity minus headroom, capped at 96 MiB."""
    try:
        cap = int(pltpu.get_tpu_info().vmem_capacity_bytes)
    except Exception:
        cap = 64 * 1024 * 1024  # conservative: v7x per-TC VMEM
    return max(32 * 1024 * 1024, min(cap - 16 * 1024 * 1024, 96 * 1024 * 1024))


def feed_forward(x, w1t, w3t, w2t, *, tm=None, th=None, gate_dtype=None):
    """x: (..., dim). w1t/w3t: (dim, hidden), w2t: (hidden, dim), pre-prepared."""
    orig_shape = x.shape
    out_dtype = x.dtype
    dim = orig_shape[-1]
    hidden = w2t.shape[0]
    assert w1t.shape == (dim, hidden)
    assert w3t.shape == (dim, hidden)
    assert w2t.shape == (hidden, dim)

    if gate_dtype is None:
        gate_dtype = _default_gate_dtype()

    x2d = x.reshape(-1, dim)           # original dtype; cast happens in-kernel
    m = x2d.shape[0]

    # ---- token tile ---------------------------------------------------------
    if tm is None:
        if m <= 256:
            tm = max(16, _round_up(m, 16))
        else:
            # >=2 token-axis steps (both v7x TensorCores get work, x/out DMA
            # pipelines) and >=256 rows to fill the 256-wide MXU M dimension.
            tm = min(512, max(256, _round_up(pl.cdiv(m, 2), 16)))
    assert tm % 16 == 0, "tm must be a multiple of 16 (bf16 sublane pairs)"

    m_pad = _round_up(m, tm)
    if m_pad != m:
        x2d = jnp.pad(x2d, ((0, m_pad - m), (0, 0)))
    m_steps = m_pad // tm

    # ---- hidden chunk (weight streaming) ------------------------------------
    x_bytes = jnp.dtype(x2d.dtype).itemsize
    o_bytes = jnp.dtype(out_dtype).itemsize
    w_bytes = jnp.dtype(w2t.dtype).itemsize

    def footprint(th_):
        w_chunk = 3 * dim * th_ * w_bytes          # w1^T + w3^T + w2^T chunks
        b = 2 * w_chunk                            # double-buffered weights
        b += 2 * tm * dim * x_bytes                # x tile (double-buffered)
        b += 2 * tm * dim * o_bytes                # out tile
        b += tm * dim * 4                          # f32 accumulator scratch
        b += 3 * tm * th_ * 4                      # h1/h3/gated temporaries
        return b

    budget = _vmem_budget_bytes()
    if th is None:
        candidates = [hidden] + [c for c in range(hidden - 128, 0, -128)
                                 if hidden % c == 0]
        th = candidates[-1]
        for c in candidates:
            if footprint(c) <= int(0.9 * budget):
                th = c
                break
    assert hidden % th == 0, "hidden must be divisible by th"
    assert th == hidden or th % 128 == 0, "th must be a multiple of 128"
    h_steps = hidden // th

    vmem_limit = int(min(budget, max(footprint(th) + (4 << 20), 32 << 20)))

    cost = pl.CostEstimate(
        flops=6 * m_pad * dim * hidden,                       # 3 matmuls
        transcendentals=m_pad * hidden,                       # sigmoid
        bytes_accessed=(3 * dim * hidden * w_bytes
                        + m_pad * dim * (x_bytes + o_bytes)),
    )

    kernel = functools.partial(_ffn_kernel, gate_dtype=gate_dtype)

    out = pl.pallas_call(
        kernel,
        out_shape=jax.ShapeDtypeStruct((m_pad, dim), out_dtype),
        grid_spec=pltpu.PrefetchScalarGridSpec(
            num_scalar_prefetch=0,
            grid=(m_steps, h_steps),                          # hidden axis last
            in_specs=[
                pl.BlockSpec((tm, dim), lambda i, k: (i, 0)),     # x tile
                pl.BlockSpec((dim, th), lambda i, k: (0, k)),     # w1^T chunk
                pl.BlockSpec((dim, th), lambda i, k: (0, k)),     # w3^T chunk
                pl.BlockSpec((th, dim), lambda i, k: (k, 0)),     # w2^T chunk
            ],
            out_specs=pl.BlockSpec((tm, dim), lambda i, k: (i, 0)),
            scratch_shapes=[pltpu.VMEM((tm, dim), jnp.float32)],  # f32 acc
        ),
        compiler_params=pltpu.CompilerParams(
            dimension_semantics=("parallel", "arbitrary"),
            vmem_limit_bytes=vmem_limit,
        ),
        cost_estimate=cost,
    )(x2d, w1t, w3t, w2t)

    if m_pad != m:
        out = out[:m]
    return out.reshape(orig_shape)


def feed_forward_ref(x, w1, w2, w3):
    """Pure-JAX f32 reference matching the PyTorch module (dropout p=0)."""
    h1 = x @ w1.T
    h3 = x @ w3.T
    return (jax.nn.silu(h1) * h3) @ w2.T


def feed_forward_ref_mixed(x, w1, w2, w3, gate_dtype):
    """bf16-operand / f32-accumulate reference matching the kernel numerics."""
    bf = jnp.bfloat16
    xb = x.astype(bf)
    h1 = jnp.dot(xb, w1.T.astype(bf), preferred_element_type=jnp.float32)
    h3 = jnp.dot(xb, w3.T.astype(bf), preferred_element_type=jnp.float32)
    h1g = h1.astype(gate_dtype)
    h3g = h3.astype(gate_dtype)
    gated = (h1g * jax.nn.sigmoid(h1g)) * h3g
    return jnp.dot(gated.astype(bf), w2.T.astype(bf),
                   preferred_element_type=jnp.float32).astype(x.dtype)


if __name__ == "__main__":
    # Config (LLMConfig equivalent): dim=128, multiple_of=256 -> hidden=512.
    dim = 128
    multiple_of = 256
    hidden = 4 * dim
    hidden = int(2 * hidden / 3)
    hidden = multiple_of * ((hidden + multiple_of - 1) // multiple_of)  # 512
    dropout_p = 0.0  # identity

    batch, seq = 2, 8
    key = jax.random.PRNGKey(0)
    kx, k1, k2, k3 = jax.random.split(key, 4)

    # Deterministic parameter init (Kaiming-uniform-like bound, as nn.Linear).
    def init_linear(k, out_f, in_f):
        bound = 1.0 / (in_f ** 0.5)
        return jax.random.uniform(k, (out_f, in_f), jnp.float32, -bound, bound)

    w1 = init_linear(k1, hidden, dim)   # (hidden, dim)
    w2 = init_linear(k2, dim, hidden)   # (dim, hidden)
    w3 = init_linear(k3, hidden, dim)   # (hidden, dim)
    x = jax.random.normal(kx, (batch, seq, dim), jnp.float32)

    # One-time weight prep (transpose + bf16 cast) — NOT in the hot path.
    w1t, w3t, w2t = prepare_ffn_weights(w1, w2, w3)

    gate_dtype = _default_gate_dtype()
    out = feed_forward(x, w1t, w3t, w2t, gate_dtype=gate_dtype)
    out = jax.block_until_ready(out)
    assert out.shape == (batch, seq, dim)

    ref_mixed = feed_forward_ref_mixed(x, w1, w2, w3, gate_dtype)
    ref_f32 = feed_forward_ref(x, w1, w2, w3)
    assert jnp.allclose(out, ref_mixed, atol=2e-2, rtol=2e-2), \
        "mismatch vs mixed-precision reference"
    assert jnp.allclose(out, ref_f32, atol=6e-2, rtol=6e-2), \
        "mismatch vs f32 reference"

    print("KERNEL_OK")
</pallas_src>

<mosaic_0001>
module attributes {stable_mosaic.version = 11 : i64} {
  func.func @_ffn_kernel(%arg0: i32, %arg1: i32, %arg2: memref<16x128xf32, #tpu.memory_space<vmem>>, %arg3: memref<128x512xbf16, #tpu.memory_space<vmem>>, %arg4: memref<128x512xbf16, #tpu.memory_space<vmem>>, %arg5: memref<512x128xbf16, #tpu.memory_space<vmem>>, %arg6: memref<16x128xf32, #tpu.memory_space<vmem>>, %arg7: memref<16x128xf32, #tpu.memory_space<vmem>>) attributes {dimension_semantics = [#tpu.dimension_semantics<parallel>, #tpu.dimension_semantics<arbitrary>], iteration_bounds = array<i64: 1, 1>, scalar_prefetch = 0 : i64, scratch_operands = 1 : i64, tpu.core_type = #tpu.core_type<tc>, window_params = [{transform_indices = @transform_0, window_bounds = array<i64: 16, 128>}, {transform_indices = @transform_1, window_bounds = array<i64: 128, 512>}, {transform_indices = @transform_2, window_bounds = array<i64: 128, 512>}, {transform_indices = @transform_3, window_bounds = array<i64: 512, 128>}, {transform_indices = @transform_4, window_bounds = array<i64: 16, 128>}]} {
    %c0_i32 = arith.constant 0 : i32
    %0 = arith.cmpi eq, %arg1, %c0_i32 : i32
    %1 = arith.extui %0 : i1 to i32
    %c0_i32_0 = arith.constant 0 : i32
    %2 = arith.cmpi ne, %1, %c0_i32_0 : i32
    scf.if %2 {
      %cst_17 = arith.constant 0.000000e+00 : f32
      %26 = vector.broadcast %cst_17 : f32 to vector<16x128xf32>
      %c0_18 = arith.constant 0 : index
      %c0_19 = arith.constant 0 : index
      %27 = vector.load %arg7[%c0_18, %c0_19] : memref<16x128xf32, #tpu.memory_space<vmem>>, vector<16x128xf32>
      tpu.vector_store %arg7[%c0_18, %c0_19], %26 {strides = array<i32>} : memref<16x128xf32, #tpu.memory_space<vmem>>, vector<16x128xf32>,
    } else {
    }
    %c0 = arith.constant 0 : index
    %c0_1 = arith.constant 0 : index
    %3 = vector.load %arg2[%c0, %c0_1] : memref<16x128xf32, #tpu.memory_space<vmem>>, vector<16x128xf32>
    %4 = arith.truncf %3 : vector<16x128xf32> to vector<16x128xbf16>
    %c0_2 = arith.constant 0 : index
    %c0_3 = arith.constant 0 : index
    %5 = vector.load %arg3[%c0_2, %c0_3] : memref<128x512xbf16, #tpu.memory_space<vmem>>, vector<128x512xbf16>
    %cst = arith.constant dense<0.000000e+00> : vector<16x512xf32>
    %6 = tpu.matmul %4, %5, %cst {dimension_numbers = #tpu.dot_dimension_numbers<[1], [0], [0], [1], [0, 0, 1, 1], [], []>} : vector<16x128xbf16>, vector<128x512xbf16>, vector<16x512xf32> -> vector<16x512xf32>
    %c0_4 = arith.constant 0 : index
    %c0_5 = arith.constant 0 : index
    %7 = vector.load %arg4[%c0_4, %c0_5] : memref<128x512xbf16, #tpu.memory_space<vmem>>, vector<128x512xbf16>
    %cst_6 = arith.constant dense<0.000000e+00> : vector<16x512xf32>
    %8 = tpu.matmul %4, %7, %cst_6 {dimension_numbers = #tpu.dot_dimension_numbers<[1], [0], [0], [1], [0, 0, 1, 1], [], []>} : vector<16x128xbf16>, vector<128x512xbf16>, vector<16x512xf32> -> vector<16x512xf32>
    %9 = arith.truncf %6 : vector<16x512xf32> to vector<16x512xbf16>
    %10 = arith.truncf %8 : vector<16x512xf32> to vector<16x512xbf16>
    %11 = arith.negf %9 : vector<16x512xbf16>
    %12 = math.exp %11 : vector<16x512xbf16>
    %cst_7 = arith.constant 1.000000e+00 : bf16
    %13 = vector.broadcast %cst_7 : bf16 to vector<16x512xbf16>
    %14 = arith.addf %13, %12 : vector<16x512xbf16>
    %15 = arith.divf %13, %14 : vector<16x512xbf16>
    %16 = arith.mulf %9, %15 : vector<16x512xbf16>
    %17 = arith.mulf %16, %10 : vector<16x512xbf16>
    %c0_8 = arith.constant 0 : index
    %c0_9 = arith.constant 0 : index
    %18 = vector.load %arg7[%c0_8, %c0_9] : memref<16x128xf32, #tpu.memory_space<vmem>>, vector<16x128xf32>
    %c0_10 = arith.constant 0 : index
    %c0_11 = arith.constant 0 : index
    %19 = vector.load %arg5[%c0_10, %c0_11] : memref<512x128xbf16, #tpu.memory_space<vmem>>, vector<512x128xbf16>
    %cst_12 = arith.constant dense<0.000000e+00> : vector<16x128xf32>
    %20 = tpu.matmul %17, %19, %cst_12 {dimension_numbers = #tpu.dot_dimension_numbers<[1], [0], [0], [1], [0, 0, 1, 1], [], []>} : vector<16x512xbf16>, vector<512x128xbf16>, vector<16x128xf32> -> vector<16x128xf32>
    %21 = arith.addf %18, %20 : vector<16x128xf32>
    %c0_13 = arith.constant 0 : index
    %c0_14 = arith.constant 0 : index
    %22 = vector.load %arg7[%c0_13, %c0_14] : memref<16x128xf32, #tpu.memory_space<vmem>>, vector<16x128xf32>
    tpu.vector_store %arg7[%c0_13, %c0_14], %21 {strides = array<i32>} : memref<16x128xf32, #tpu.memory_space<vmem>>, vector<16x128xf32>,
    %c0_i32_15 = arith.constant 0 : i32
    %23 = arith.cmpi eq, %arg1, %c0_i32_15 : i32
    %24 = arith.extui %23 : i1 to i32
    %c0_i32_16 = arith.constant 0 : i32
    %25 = arith.cmpi ne, %24, %c0_i32_16 : i32
    scf.if %25 {
      %c0_17 = arith.constant 0 : index
      %c0_18 = arith.constant 0 : index
      %26 = vector.load %arg7[%c0_17, %c0_18] : memref<16x128xf32, #tpu.memory_space<vmem>>, vector<16x128xf32>
      %c0_19 = arith.constant 0 : index
      %c0_20 = arith.constant 0 : index
      %27 = vector.load %arg6[%c0_19, %c0_20] : memref<16x128xf32, #tpu.memory_space<vmem>>, vector<16x128xf32>
      tpu.vector_store %arg6[%c0_19, %c0_20], %26 {strides = array<i32>} : memref<16x128xf32, #tpu.memory_space<vmem>>, vector<16x128xf32>,
    } else {
    }
    return
  }
  func.func @transform_0(%arg0: i32, %arg1: i32) -> (i32, i32) {
    %c0_i32 = arith.constant 0 : i32
    %c0_i32_0 = arith.constant 0 : i32
    return %arg0, %c0_i32 : i32, i32
  }
  func.func @transform_1(%arg0: i32, %arg1: i32) -> (i32, i32) {
    %c0_i32 = arith.constant 0 : i32
    %c0_i32_0 = arith.constant 0 : i32
    return %c0_i32, %arg1 : i32, i32
  }
  func.func @transform_2(%arg0: i32, %arg1: i32) -> (i32, i32) {
    %c0_i32 = arith.constant 0 : i32
    %c0_i32_0 = arith.constant 0 : i32
    return %c0_i32, %arg1 : i32, i32
  }
  func.func @transform_3(%arg0: i32, %arg1: i32) -> (i32, i32) {
    %c0_i32 = arith.constant 0 : i32
    %c0_i32_0 = arith.constant 0 : i32
    return %arg1, %c0_i32 : i32, i32
  }
  func.func @transform_4(%arg0: i32, %arg1: i32) -> (i32, i32) {
    %c0_i32 = arith.constant 0 : i32
    %c0_i32_0 = arith.constant 0 : i32
    return %arg0, %c0_i32 : i32, i32
  }
}

</mosaic_0001>

<llo_original>
// kernel: tpu_custom_call.1
$region0: #{tpu_custom_call.1}
  #allocation0 [shape = 'u32[]', space=smem, size = 0x4, offset = 0x4, fixed_abs, tag = 'smem constant byte address 0x4 - core index']
  #allocation1 [shape = 'u32[144,128]{1,0:T(1,128)}', space=vmem, size = 0x12000, scoped, tag = 'internal scratch']
  #allocation2 [shape = 'f32[16,128]{1,0:T(8,128)}', space=vmem, size = 0x2000, scoped, tag = 'scratch operand']
  %s0 = inlined_call_operand.hbm [shape: f32[16,128], index: 0, kind: input, shape index: {}]
  %s1 = inlined_call_operand.hbm [shape: bf16[128,512], index: 1, kind: input, shape index: {}]
  %s2 = inlined_call_operand.hbm [shape: bf16[128,512], index: 2, kind: input, shape index: {}]
  %s3 = inlined_call_operand.hbm [shape: bf16[512,128], index: 3, kind: input, shape index: {}]
  %s4 = inlined_call_operand.hbm [shape: f32[16,128], index: 4, kind: output, shape index: {}]
  %s5 = sld [smem:[#allocation0]]
  $region50: #{tpu_custom_call.1} parent=0
    _
  %s7 = ssub.s32 1, %s5
  %s8 = scalar_select 0, %s7, %s5
  $region1: #{tpu_custom_call.1} parent=0
    #allocation3 [shape = 'u8[8192]{0}', space=vmem, size = 0x2000, scoped, tag = 'input window, operand 0, single buffered']
    #allocation4 [shape = 's32[1]{0}', space=sflag, size = 0x4, scoped, tag = 'scoped memory for tpu_custom_call.1']
    #allocation5 [shape = 's32[1]{0}', space=sflag, size = 0x4, scoped, tag = 'scoped memory for tpu_custom_call.1']
    #allocation6 [shape = 'u8[131072]{0}', space=vmem, size = 0x20000, scoped, tag = 'input window, operand 1, single buffered']
    #allocation7 [shape = 's32[1]{0}', space=sflag, size = 0x4, scoped, tag = 'scoped memory for tpu_custom_call.1']
    #allocation8 [shape = 'u8[131072]{0}', space=vmem, size = 0x20000, scoped, tag = 'input window, operand 2, single buffered']
    #allocation9 [shape = 'u8[131072]{0}', space=vmem, size = 0x20000, scoped, tag = 'input window, operand 3, single buffered']
    #allocation10 [shape = 's32[1]{0}', space=sflag, size = 0x4, scoped, tag = 'scoped memory for tpu_custom_call.1']
    #allocation11 [shape = 'u8[8192]{0}', space=vmem, size = 0x2000, scoped, tag = 'output window, operand 0, single buffered']
    %9 = vsyncpa [#allocation4], 0
    %10 = vsyncpa [#allocation7], 0
    %11 = vsyncpa [#allocation10], 0
    %12 = vsyncpa [#allocation5], 0
    // Predicated region
    $region2: #{tpu_custom_call.1} parent=1 // pred_check
      _
    $region3: #{tpu_custom_call.1} parent=1 // pred_check_branch
      %14 = sbr.rel (0) target = $region5
    $region4: #{tpu_custom_call.1} parent=1 // pred_region
      %s16 = ssub.s32 256, 256
      %17 = vsyncadd [#allocation4], %s16
      %s18 = sshll.u32 [#allocation3], 4
      %s19 = int_to_ptr.vmem [resolvable:$true] %s18
      %24 = dma.hbm_to_vmem [thread:$0]  %s0, 256, %s19, [#allocation4], 128, 128, 8
    $region5: #{tpu_custom_call.1} parent=1 // pred_fallthru
      _
    // Predicated region
    $region6: #{tpu_custom_call.1} parent=1 // pred_check
      _
    $region7: #{tpu_custom_call.1} parent=1 // pred_check_branch
      %26 = sbr.rel (0) target = $region9
    $region8: #{tpu_custom_call.1} parent=1 // pred_region
      %s28 = ssub.s32 4096, 4096
      %29 = vsyncadd [#allocation7], %s28
      %s30 = sshll.u32 [#allocation6], 4
      %s31 = int_to_ptr.vmem [resolvable:$true] %s30
      %36 = dma.hbm_to_vmem [thread:$0]  %s1, 4096, %s31, [#allocation7], 256, 256, 16
    $region9: #{tpu_custom_call.1} parent=1 // pred_fallthru
      _
    // Predicated region
    $region10: #{tpu_custom_call.1} parent=1 // pred_check
      _
    $region11: #{tpu_custom_call.1} parent=1 // pred_check_branch
      %38 = sbr.rel (0) target = $region13
    $region12: #{tpu_custom_call.1} parent=1 // pred_region
      %s40 = ssub.s32 4096, 4096
      %41 = vsyncadd [#allocation7], %s40
      %s42 = sshll.u32 [#allocation8], 4
      %s43 = int_to_ptr.vmem [resolvable:$true] %s42
      %48 = dma.hbm_to_vmem [thread:$0]  %s2, 4096, %s43, [#allocation7], 256, 256, 16
    $region13: #{tpu_custom_call.1} parent=1 // pred_fallthru
      _
    // Predicated region
    $region14: #{tpu_custom_call.1} parent=1 // pred_check
      _
    $region15: #{tpu_custom_call.1} parent=1 // pred_check_branch
      %50 = sbr.rel (0) target = $region17
    $region16: #{tpu_custom_call.1} parent=1 // pred_region
      %s52 = ssub.s32 4096, 4096
      %53 = vsyncadd [#allocation10], %s52
      %s54 = sshll.u32 [#allocation9], 4
      %s55 = int_to_ptr.vmem [resolvable:$true] %s54
      %60 = dma.hbm_to_vmem [thread:$0]  %s3, 4096, %s55, [#allocation10], 64, 64, 4
    $region17: #{tpu_custom_call.1} parent=1 // pred_fallthru
      _
    // Predicated region
    $region18: #{tpu_custom_call.1} parent=1 // pred_check
      _
    $region19: #{tpu_custom_call.1} parent=1 // pred_check_branch
      %62 = sbr.rel (0) target = $region21
    $region20: #{tpu_custom_call.1} parent=1 // pred_region
      %63 = dma.done [#allocation4], 256
    $region21: #{tpu_custom_call.1} parent=1 // pred_fallthru
      _
    // Predicated region
    $region22: #{tpu_custom_call.1} parent=1 // pred_check
      _
    $region23: #{tpu_custom_call.1} parent=1 // pred_check_branch
      %65 = sbr.rel (0) target = $region25
    $region24: #{tpu_custom_call.1} parent=1 // pred_region
      %66 = dma.done [#allocation7], 4096
    $region25: #{tpu_custom_call.1} parent=1 // pred_fallthru
      _
    // Predicated region
    $region26: #{tpu_custom_call.1} parent=1 // pred_check
      _
    $region27: #{tpu_custom_call.1} parent=1 // pred_check_branch
      %68 = sbr.rel (0) target = $region29
    $region28: #{tpu_custom_call.1} parent=1 // pred_region
      %69 = dma.done [#allocation7], 4096
    $region29: #{tpu_custom_call.1} parent=1 // pred_fallthru
      _
    // Predicated region
    $region30: #{tpu_custom_call.1} parent=1 // pred_check
      _
    $region31: #{tpu_custom_call.1} parent=1 // pred_check_branch
      %71 = sbr.rel (0) target = $region33
    $region32: #{tpu_custom_call.1} parent=1 // pred_region
      %72 = dma.done [#allocation10], 4096
    $region33: #{tpu_custom_call.1} parent=1 // pred_fallthru
      _
    %p75 = scmp.eq.s32.totalorder 0, 0
    // Predicated region
    $region34: #{tpu_custom_call.1} parent=1 // pred_check
      %p76 = pneg %p75
    $region35: #{tpu_custom_call.1} parent=1 // pred_check_branch
      %78 = sbr.rel (%p76) target = $region37
    $region36: #{tpu_custom_call.1} parent=1 // pred_region
      %79 = vst [vmem:[#allocation2] sm:$0xff] 0.0
      %80 = vst [vmem:[#allocation2 + $0x8] sm:$0xff] 0.0
    $region37: #{tpu_custom_call.1} parent=1 // pred_fallthru
      _
    %v81 = vld [vmem:[#allocation3] sm:$0xff]
    %v82 = vld [vmem:[#allocation3 + $0x8] sm:$0xff]
    %v83 = vpack.c.bf16 %v82, %v81
    %v84 = vld [vmem:[#allocation6] sm:$0xff]
    %v85 = vld [vmem:[#allocation6 + $0x8] sm:$0xff]
    %v86 = vld [vmem:[#allocation6 + $0x10] sm:$0xff]
    %v87 = vld [vmem:[#allocation6 + $0x18] sm:$0xff]
    %v88 = vld [vmem:[#allocation6 + $0x20] sm:$0xff]
    %v89 = vld [vmem:[#allocation6 + $0x28] sm:$0xff]
    %v90 = vld [vmem:[#allocation6 + $0x30] sm:$0xff]
    %v91 = vld [vmem:[#allocation6 + $0x38] sm:$0xff]
    %v92 = vld [vmem:[#allocation6 + $0x40] sm:$0xff]
    %v93 = vld [vmem:[#allocation6 + $0x48] sm:$0xff]
    %v94 = vld [vmem:[#allocation6 + $0x50] sm:$0xff]
    %v95 = vld [vmem:[#allocation6 + $0x58] sm:$0xff]
    %v96 = vld [vmem:[#allocation6 + $0x60] sm:$0xff]
    %v97 = vld [vmem:[#allocation6 + $0x68] sm:$0xff]
    %v98 = vld [vmem:[#allocation6 + $0x70] sm:$0xff]
    %v99 = vld [vmem:[#allocation6 + $0x78] sm:$0xff]
    %v100 = vld [vmem:[#allocation6 + $0x80] sm:$0xff]
    %v101 = vld [vmem:[#allocation6 + $0x88] sm:$0xff]
    %v102 = vld [vmem:[#allocation6 + $0x90] sm:$0xff]
    %v103 = vld [vmem:[#allocation6 + $0x98] sm:$0xff]
    %v104 = vld [vmem:[#allocation6 + $0xa0] sm:$0xff]
    %v105 = vld [vmem:[#allocation6 + $0xa8] sm:$0xff]
    %v106 = vld [vmem:[#allocation6 + $0xb0] sm:$0xff]
    %v107 = vld [vmem:[#allocation6 + $0xb8] sm:$0xff]
    %v108 = vld [vmem:[#allocation6 + $0xc0] sm:$0xff]
    %v109 = vld [vmem:[#allocation6 + $0xc8] sm:$0xff]
    %v110 = vld [vmem:[#allocation6 + $0xd0] sm:$0xff]
    %v111 = vld [vmem:[#allocation6 + $0xd8] sm:$0xff]
    %v112 = vld [vmem:[#allocation6 + $0xe0] sm:$0xff]
    %v113 = vld [vmem:[#allocation6 + $0xe8] sm:$0xff]
    %v114 = vld [vmem:[#allocation6 + $0xf0] sm:$0xff]
    %v115 = vld [vmem:[#allocation6 + $0xf8] sm:$0xff]
    %v148 = vunpack.c.l.b16 %v84
    %v149 = vunpack.c.h.b16 %v84
    %v150 = vunpack.c.l.b16 %v85
    %v151 = vunpack.c.h.b16 %v85
    %v152 = vunpack.c.l.b16 %v86
    %v153 = vunpack.c.h.b16 %v86
    %v154 = vunpack.c.l.b16 %v87
    %v155 = vunpack.c.h.b16 %v87
    %v156 = vunpack.c.l.b16 %v88
    %v157 = vunpack.c.h.b16 %v88
    %v158 = vunpack.c.l.b16 %v89
    %v159 = vunpack.c.h.b16 %v89
    %v160 = vunpack.c.l.b16 %v90
    %v161 = vunpack.c.h.b16 %v90
    %v162 = vunpack.c.l.b16 %v91
    %v163 = vunpack.c.h.b16 %v91
    %v164 = vunpack.c.l.b16 %v92
    %v165 = vunpack.c.h.b16 %v92
    %v166 = vunpack.c.l.b16 %v93
    %v167 = vunpack.c.h.b16 %v93
    %v168 = vunpack.c.l.b16 %v94
    %v169 = vunpack.c.h.b16 %v94
    %v170 = vunpack.c.l.b16 %v95
    %v171 = vunpack.c.h.b16 %v95
    %v172 = vunpack.c.l.b16 %v96
    %v173 = vunpack.c.h.b16 %v96
    %v174 = vunpack.c.l.b16 %v97
    %v175 = vunpack.c.h.b16 %v97
    %v176 = vunpack.c.l.b16 %v98
    %v177 = vunpack.c.h.b16 %v98
    %v178 = vunpack.c.l.b16 %v99
    %v179 = vunpack.c.h.b16 %v99
    %v180 = vunpack.c.l.b16 %v100
    %v181 = vunpack.c.h.b16 %v100
    %v182 = vunpack.c.l.b16 %v101
    %v183 = vunpack.c.h.b16 %v101
    %v184 = vunpack.c.l.b16 %v102
    %v185 = vunpack.c.h.b16 %v102
    %v186 = vunpack.c.l.b16 %v103
    %v187 = vunpack.c.h.b16 %v103
    %v188 = vunpack.c.l.b16 %v104
    %v189 = vunpack.c.h.b16 %v104
    %v190 = vunpack.c.l.b16 %v105
    %v191 = vunpack.c.h.b16 %v105
    %v192 = vunpack.c.l.b16 %v106
    %v193 = vunpack.c.h.b16 %v106
    %v194 = vunpack.c.l.b16 %v107
    %v195 = vunpack.c.h.b16 %v107
    %v196 = vunpack.c.l.b16 %v108
    %v197 = vunpack.c.h.b16 %v108
    %v198 = vunpack.c.l.b16 %v109
    %v199 = vunpack.c.h.b16 %v109
    %v200 = vunpack.c.l.b16 %v110
    %v201 = vunpack.c.h.b16 %v110
    %v202 = vunpack.c.l.b16 %v111
    %v203 = vunpack.c.h.b16 %v111
    %v204 = vunpack.c.l.b16 %v112
    %v205 = vunpack.c.h.b16 %v112
    %v206 = vunpack.c.l.b16 %v113
    %v207 = vunpack.c.h.b16 %v113
    %v208 = vunpack.c.l.b16 %v114
    %v209 = vunpack.c.h.b16 %v114
    %v210 = vunpack.c.l.b16 %v115
    %v211 = vunpack.c.h.b16 %v115
    %v212 = vpack.c.b16 %v152, %v148
    %v213 = vpack.c.b16 %v153, %v149
    %v214 = vpack.c.b16 %v154, %v150
    %v215 = vpack.c.b16 %v155, %v151
    %v216 = vpack.c.b16 %v160, %v156
    %v217 = vpack.c.b16 %v161, %v157
    %v218 = vpack.c.b16 %v162, %v158
    %v219 = vpack.c.b16 %v163, %v159
    %v220 = vpack.c.b16 %v168, %v164
    %v221 = vpack.c.b16 %v169, %v165
    %v222 = vpack.c.b16 %v170, %v166
    %v223 = vpack.c.b16 %v171, %v167
    %v224 = vpack.c.b16 %v176, %v172
    %v225 = vpack.c.b16 %v177, %v173
    %v226 = vpack.c.b16 %v178, %v174
    %v227 = vpack.c.b16 %v179, %v175
    %v228 = vpack.c.b16 %v184, %v180
    %v229 = vpack.c.b16 %v185, %v181
    %v230 = vpack.c.b16 %v186, %v182
    %v231 = vpack.c.b16 %v187, %v183
    %v232 = vpack.c.b16 %v192, %v188
    %v233 = vpack.c.b16 %v193, %v189
    %v234 = vpack.c.b16 %v194, %v190
    %v235 = vpack.c.b16 %v195, %v191
    %v236 = vpack.c.b16 %v200, %v196
    %v237 = vpack.c.b16 %v201, %v197
    %v238 = vpack.c.b16 %v202, %v198
    %v239 = vpack.c.b16 %v203, %v199
    %v240 = vpack.c.b16 %v208, %v204
    %v241 = vpack.c.b16 %v209, %v205
    %v242 = vpack.c.b16 %v210, %v206
    %v243 = vpack.c.b16 %v211, %v207
    %276 = vmatprep.subr.bf16.mxu0 %v213
    %277 = vmatpush1.bf16.msra.mxu0 %v212
    %278 = vmatprep.subr.bf16.mxu0 %v217
    %279 = vmatpush1.bf16.msra.mxu0 %v216
    %280 = vmatprep.subr.bf16.mxu0 %v221
    %281 = vmatpush1.bf16.msra.mxu0 %v220
    %282 = vmatprep.subr.bf16.mxu0 %v225
    %283 = vmatpush1.bf16.msra.mxu0 %v224
    %284 = vmatprep.subr.bf16.mxu0 %v229
    %285 = vmatpush1.bf16.msra.mxu0 %v228
    %286 = vmatprep.subr.bf16.mxu0 %v233
    %287 = vmatpush1.bf16.msra.mxu0 %v232
    %288 = vmatprep.subr.bf16.mxu0 %v237
    %289 = vmatpush1.bf16.msra.mxu0 %v236
    %290 = vmatprep.subr.bf16.mxu0 %v241
    %291 = vmatpush1.bf16.msra.mxu0 %v240
    %292 = vmatprep.subr.bf16.mxu0 0
    %293 = vmatpush1.bf16.msra.mxu0 0
    %294 = vmatprep.subr.bf16.mxu0 0
    %295 = vmatpush1.bf16.msra.mxu0 0
    %296 = vmatprep.subr.bf16.mxu0 0
    %297 = vmatpush1.bf16.msra.mxu0 0
    %298 = vmatprep.subr.bf16.mxu0 0
    %299 = vmatpush1.bf16.msra.mxu0 0
    %300 = vmatprep.subr.bf16.mxu0 0
    %301 = vmatpush1.bf16.msra.mxu0 0
    %302 = vmatprep.subr.bf16.mxu0 0
    %303 = vmatpush1.bf16.msra.mxu0 0
    %304 = vmatprep.subr.bf16.mxu0 0
    %305 = vmatpush1.bf16.msra.mxu0 0
    %306 = vmatprep.subr.bf16.mxu0 0
    %307 = vmatpush1.bf16.msra.mxu0 0
    %308 = vmatprep.mubr.bf16.mxu0 0
    %309 = vmatmul.mubr.bf16.gmra.mrb[0].mxu0 %v83
    %v310 = vpop.f32.mrb[0].mxu0
    %v311 = vadd.f32 0.0, %v310
    %v312 = vpop.f32.mrb[0].mxu0
    %v313 = vadd.f32 0.0, %v312
    %v314 = vpop.f32.mrb[0].mxu0
    %v315 = vadd.f32 0.0, %v314
    %v316 = vpop.f32.mrb[0].mxu0
    %v317 = vadd.f32 0.0, %v316
    %318 = vdwg.mxu0
    %319 = vmatprep.subr.bf16.mxu0 %v215
    %320 = vmatpush1.bf16.msra.mxu0 %v214
    %321 = vmatprep.subr.bf16.mxu0 %v219
    %322 = vmatpush1.bf16.msra.mxu0 %v218
    %323 = vmatprep.subr.bf16.mxu0 %v223
    %324 = vmatpush1.bf16.msra.mxu0 %v222
    %325 = vmatprep.subr.bf16.mxu0 %v227
    %326 = vmatpush1.bf16.msra.mxu0 %v226
    %327 = vmatprep.subr.bf16.mxu0 %v231
    %328 = vmatpush1.bf16.msra.mxu0 %v230
    %329 = vmatprep.subr.bf16.mxu0 %v235
    %330 = vmatpush1.bf16.msra.mxu0 %v234
    %331 = vmatprep.subr.bf16.mxu0 %v239
    %332 = vmatpush1.bf16.msra.mxu0 %v238
    %333 = vmatprep.subr.bf16.mxu0 %v243
    %334 = vmatpush1.bf16.msra.mxu0 %v242
    %335 = vmatprep.subr.bf16.mxu0 0
    %336 = vmatpush1.bf16.msra.mxu0 0
    %337 = vmatprep.subr.bf16.mxu0 0
    %338 = vmatpush1.bf16.msra.mxu0 0
    %339 = vmatprep.subr.bf16.mxu0 0
    %340 = vmatpush1.bf16.msra.mxu0 0
    %341 = vmatprep.subr.bf16.mxu0 0
    %342 = vmatpush1.bf16.msra.mxu0 0
    %343 = vmatprep.subr.bf16.mxu0 0
    %344 = vmatpush1.bf16.msra.mxu0 0
    %345 = vmatprep.subr.bf16.mxu0 0
    %346 = vmatpush1.bf16.msra.mxu0 0
    %347 = vmatprep.subr.bf16.mxu0 0
    %348 = vmatpush1.bf16.msra.mxu0 0
    %349 = vmatprep.subr.bf16.mxu0 0
    %350 = vmatpush1.bf16.msra.mxu0 0
    %351 = vmatprep.mubr.bf16.mxu0 0
    %352 = vmatmul.mubr.bf16.gmra.mrb[0].mxu0 %v83
    %v353 = vpop.f32.mrb[0].mxu0
    %v354 = vadd.f32 0.0, %v353
    %v355 = vpop.f32.mrb[0].mxu0
    %v356 = vadd.f32 0.0, %v355
    %v357 = vpop.f32.mrb[0].mxu0
    %v358 = vadd.f32 0.0, %v357
    %v359 = vpop.f32.mrb[0].mxu0
    %v360 = vadd.f32 0.0, %v359
    %361 = vdwg.mxu0
    %v362 = vld [vmem:[#allocation8] sm:$0xff]
    %v363 = vld [vmem:[#allocation8 + $0x8] sm:$0xff]
    %v364 = vld [vmem:[#allocation8 + $0x10] sm:$0xff]
    %v365 = vld [vmem:[#allocation8 + $0x18] sm:$0xff]
    %v366 = vld [vmem:[#allocation8 + $0x20] sm:$0xff]
    %v367 = vld [vmem:[#allocation8 + $0x28] sm:$0xff]
    %v368 = vld [vmem:[#allocation8 + $0x30] sm:$0xff]
    %v369 = vld [vmem:[#allocation8 + $0x38] sm:$0xff]
    %v370 = vld [vmem:[#allocation8 + $0x40] sm:$0xff]
    %v371 = vld [vmem:[#allocation8 + $0x48] sm:$0xff]
    %v372 = vld [vmem:[#allocation8 + $0x50] sm:$0xff]
    %v373 = vld [vmem:[#allocation8 + $0x58] sm:$0xff]
    %v374 = vld [vmem:[#allocation8 + $0x60] sm:$0xff]
    %v375 = vld [vmem:[#allocation8 + $0x68] sm:$0xff]
    %v376 = vld [vmem:[#allocation8 + $0x70] sm:$0xff]
    %v377 = vld [vmem:[#allocation8 + $0x78] sm:$0xff]
    %v378 = vld [vmem:[#allocation8 + $0x80] sm:$0xff]
    %v379 = vld [vmem:[#allocation8 + $0x88] sm:$0xff]
    %v380 = vld [vmem:[#allocation8 + $0x90] sm:$0xff]
    %v381 = vld [vmem:[#allocation8 + $0x98] sm:$0xff]
    %v382 = vld [vmem:[#allocation8 + $0xa0] sm:$0xff]
    %v383 = vld [vmem:[#allocation8 + $0xa8] sm:$0xff]
    %v384 = vld [vmem:[#allocation8 + $0xb0] sm:$0xff]
    %v385 = vld [vmem:[#allocation8 + $0xb8] sm:$0xff]
    %v386 = vld [vmem:[#allocation8 + $0xc0] sm:$0xff]
    %v387 = vld [vmem:[#allocation8 + $0xc8] sm:$0xff]
    %v388 = vld [vmem:[#allocation8 + $0xd0] sm:$0xff]
    %v389 = vld [vmem:[#allocation8 + $0xd8] sm:$0xff]
    %v390 = vld [vmem:[#allocation8 + $0xe0] sm:$0xff]
    %v391 = vld [vmem:[#allocation8 + $0xe8] sm:$0xff]
    %v392 = vld [vmem:[#allocation8 + $0xf0] sm:$0xff]
    %v393 = vld [vmem:[#allocation8 + $0xf8] sm:$0xff]
    %v426 = vunpack.c.l.b16 %v362
    %v427 = vunpack.c.h.b16 %v362
    %v428 = vunpack.c.l.b16 %v363
    %v429 = vunpack.c.h.b16 %v363
    %v430 = vunpack.c.l.b16 %v364
    %v431 = vunpack.c.h.b16 %v364
    %v432 = vunpack.c.l.b16 %v365
    %v433 = vunpack.c.h.b16 %v365
    %v434 = vunpack.c.l.b16 %v366
    %v435 = vunpack.c.h.b16 %v366
    %v436 = vunpack.c.l.b16 %v367
    %v437 = vunpack.c.h.b16 %v367
    %v438 = vunpack.c.l.b16 %v368
    %v439 = vunpack.c.h.b16 %v368
    %v440 = vunpack.c.l.b16 %v369
    %v441 = vunpack.c.h.b16 %v369
    %v442 = vunpack.c.l.b16 %v370
    %v443 = vunpack.c.h.b16 %v370
    %v444 = vunpack.c.l.b16 %v371
    %v445 = vunpack.c.h.b16 %v371
    %v446 = vunpack.c.l.b16 %v372
    %v447 = vunpack.c.h.b16 %v372
    %v448 = vunpack.c.l.b16 %v373
    %v449 = vunpack.c.h.b16 %v373
    %v450 = vunpack.c.l.b16 %v374
    %v451 = vunpack.c.h.b16 %v374
    %v452 = vunpack.c.l.b16 %v375
    %v453 = vunpack.c.h.b16 %v375
    %v454 = vunpack.c.l.b16 %v376
    %v455 = vunpack.c.h.b16 %v376
    %v456 = vunpack.c.l.b16 %v377
    %v457 = vunpack.c.h.b16 %v377
    %v458 = vunpack.c.l.b16 %v378
    %v459 = vunpack.c.h.b16 %v378
    %v460 = vunpack.c.l.b16 %v379
    %v461 = vunpack.c.h.b16 %v379
    %v462 = vunpack.c.l.b16 %v380
    %v463 = vunpack.c.h.b16 %v380
    %v464 = vunpack.c.l.b16 %v381
    %v465 = vunpack.c.h.b16 %v381
    %v466 = vunpack.c.l.b16 %v382
    %v467 = vunpack.c.h.b16 %v382
    %v468 = vunpack.c.l.b16 %v383
    %v469 = vunpack.c.h.b16 %v383
    %v470 = vunpack.c.l.b16 %v384
    %v471 = vunpack.c.h.b16 %v384
    %v472 = vunpack.c.l.b16 %v385
    %v473 = vunpack.c.h.b16 %v385
    %v474 = vunpack.c.l.b16 %v386
    %v475 = vunpack.c.h.b16 %v386
    %v476 = vunpack.c.l.b16 %v387
    %v477 = vunpack.c.h.b16 %v387
    %v478 = vunpack.c.l.b16 %v388
    %v479 = vunpack.c.h.b16 %v388
    %v480 = vunpack.c.l.b16 %v389
    %v481 = vunpack.c.h.b16 %v389
    %v482 = vunpack.c.l.b16 %v390
    %v483 = vunpack.c.h.b16 %v390
    %v484 = vunpack.c.l.b16 %v391
    %v485 = vunpack.c.h.b16 %v391
    %v486 = vunpack.c.l.b16 %v392
    %v487 = vunpack.c.h.b16 %v392
    %v488 = vunpack.c.l.b16 %v393
    %v489 = vunpack.c.h.b16 %v393
    %v490 = vpack.c.b16 %v430, %v426
    %v491 = vpack.c.b16 %v431, %v427
    %v492 = vpack.c.b16 %v432, %v428
    %v493 = vpack.c.b16 %v433, %v429
    %v494 = vpack.c.b16 %v438, %v434
    %v495 = vpack.c.b16 %v439, %v435
    %v496 = vpack.c.b16 %v440, %v436
    %v497 = vpack.c.b16 %v441, %v437
    %v498 = vpack.c.b16 %v446, %v442
    %v499 = vpack.c.b16 %v447, %v443
    %v500 = vpack.c.b16 %v448, %v444
    %v501 = vpack.c.b16 %v449, %v445
    %v502 = vpack.c.b16 %v454, %v450
    %v503 = vpack.c.b16 %v455, %v451
    %v504 = vpack.c.b16 %v456, %v452
    %v505 = vpack.c.b16 %v457, %v453
    %v506 = vpack.c.b16 %v462, %v458
    %v507 = vpack.c.b16 %v463, %v459
    %v508 = vpack.c.b16 %v464, %v460
    %v509 = vpack.c.b16 %v465, %v461
    %v510 = vpack.c.b16 %v470, %v466
    %v511 = vpack.c.b16 %v471, %v467
    %v512 = vpack.c.b16 %v472, %v468
    %v513 = vpack.c.b16 %v473, %v469
    %v514 = vpack.c.b16 %v478, %v474
    %v515 = vpack.c.b16 %v479, %v475
    %v516 = vpack.c.b16 %v480, %v476
    %v517 = vpack.c.b16 %v481, %v477
    %v518 = vpack.c.b16 %v486, %v482
    %v519 = vpack.c.b16 %v487, %v483
    %v520 = vpack.c.b16 %v488, %v484
    %v521 = vpack.c.b16 %v489, %v485
    %554 = vmatprep.subr.bf16.mxu0 %v491
    %555 = vmatpush1.bf16.msra.mxu0 %v490
    %556 = vmatprep.subr.bf16.mxu0 %v495
    %557 = vmatpush1.bf16.msra.mxu0 %v494
    %558 = vmatprep.subr.bf16.mxu0 %v499
    %559 = vmatpush1.bf16.msra.mxu0 %v498
    %560 = vmatprep.subr.bf16.mxu0 %v503
    %561 = vmatpush1.bf16.msra.mxu0 %v502
    %562 = vmatprep.subr.bf16.mxu0 %v507
    %563 = vmatpush1.bf16.msra.mxu0 %v506
    %564 = vmatprep.subr.bf16.mxu0 %v511
    %565 = vmatpush1.bf16.msra.mxu0 %v510
    %566 = vmatprep.subr.bf16.mxu0 %v515
    %567 = vmatpush1.bf16.msra.mxu0 %v514
    %568 = vmatprep.subr.bf16.mxu0 %v519
    %569 = vmatpush1.bf16.msra.mxu0 %v518
    %570 = vmatprep.subr.bf16.mxu0 0
    %571 = vmatpush1.bf16.msra.mxu0 0
    %572 = vmatprep.subr.bf16.mxu0 0
    %573 = vmatpush1.bf16.msra.mxu0 0
    %574 = vmatprep.subr.bf16.mxu0 0
    %575 = vmatpush1.bf16.msra.mxu0 0
    %576 = vmatprep.subr.bf16.mxu0 0
    %577 = vmatpush1.bf16.msra.mxu0 0
    %578 = vmatprep.subr.bf16.mxu0 0
    %579 = vmatpush1.bf16.msra.mxu0 0
    %580 = vmatprep.subr.bf16.mxu0 0
    %581 = vmatpush1.bf16.msra.mxu0 0
    %582 = vmatprep.subr.bf16.mxu0 0
    %583 = vmatpush1.bf16.msra.mxu0 0
    %584 = vmatprep.subr.bf16.mxu0 0
    %585 = vmatpush1.bf16.msra.mxu0 0
    %586 = vmatprep.mubr.bf16.mxu0 0
    %587 = vmatmul.mubr.bf16.gmra.mrb[0].mxu0 %v83
    %v588 = vpop.f32.mrb[0].mxu0
    %v589 = vadd.f32 0.0, %v588
    %v590 = vpop.f32.mrb[0].mxu0
    %v591 = vadd.f32 0.0, %v590
    %v592 = vpop.f32.mrb[0].mxu0
    %v593 = vadd.f32 0.0, %v592
    %v594 = vpop.f32.mrb[0].mxu0
    %v595 = vadd.f32 0.0, %v594
    %596 = vdwg.mxu0
    %597 = vmatprep.subr.bf16.mxu0 %v493
    %598 = vmatpush1.bf16.msra.mxu0 %v492
    %599 = vmatprep.subr.bf16.mxu0 %v497
    %600 = vmatpush1.bf16.msra.mxu0 %v496
    %601 = vmatprep.subr.bf16.mxu0 %v501
    %602 = vmatpush1.bf16.msra.mxu0 %v500
    %603 = vmatprep.subr.bf16.mxu0 %v505
    %604 = vmatpush1.bf16.msra.mxu0 %v504
    %605 = vmatprep.subr.bf16.mxu0 %v509
    %606 = vmatpush1.bf16.msra.mxu0 %v508
    %607 = vmatprep.subr.bf16.mxu0 %v513
    %608 = vmatpush1.bf16.msra.mxu0 %v512
    %609 = vmatprep.subr.bf16.mxu0 %v517
    %610 = vmatpush1.bf16.msra.mxu0 %v516
    %611 = vmatprep.subr.bf16.mxu0 %v521
    %612 = vmatpush1.bf16.msra.mxu0 %v520
    %613 = vmatprep.subr.bf16.mxu0 0
    %614 = vmatpush1.bf16.msra.mxu0 0
    %615 = vmatprep.subr.bf16.mxu0 0
    %616 = vmatpush1.bf16.msra.mxu0 0
    %617 = vmatprep.subr.bf16.mxu0 0
    %618 = vmatpush1.bf16.msra.mxu0 0
    %619 = vmatprep.subr.bf16.mxu0 0
    %620 = vmatpush1.bf16.msra.mxu0 0
    %621 = vmatprep.subr.bf16.mxu0 0
    %622 = vmatpush1.bf16.msra.mxu0 0
    %623 = vmatprep.subr.bf16.mxu0 0
    %624 = vmatpush1.bf16.msra.mxu0 0
    %625 = vmatprep.subr.bf16.mxu0 0
    %626 = vmatpush1.bf16.msra.mxu0 0
    %627 = vmatprep.subr.bf16.mxu0 0
    %628 = vmatpush1.bf16.msra.mxu0 0
    %629 = vmatprep.mubr.bf16.mxu0 0
    %630 = vmatmul.mubr.bf16.gmra.mrb[0].mxu0 %v83
    %v631 = vpop.f32.mrb[0].mxu0
    %v632 = vadd.f32 0.0, %v631
    %v633 = vpop.f32.mrb[0].mxu0
    %v634 = vadd.f32 0.0, %v633
    %v635 = vpop.f32.mrb[0].mxu0
    %v636 = vadd.f32 0.0, %v635
    %v637 = vpop.f32.mrb[0].mxu0
    %v638 = vadd.f32 0.0, %v637
    %639 = vdwg.mxu0
    %v640 = vpack.c.bf16 %v315, %v311
    %v641 = vpack.c.bf16 %v317, %v313
    %v642 = vpack.c.bf16 %v358, %v354
    %v643 = vpack.c.bf16 %v360, %v356
    %v644 = vpack.c.bf16 %v593, %v589
    %v645 = vpack.c.bf16 %v595, %v591
    %v646 = vpack.c.bf16 %v636, %v632
    %v647 = vpack.c.bf16 %v638, %v634
    %v648 = vxor.u32 %v640, 2147516416
    %v649 = vxor.u32 %v641, 2147516416
    %v650 = vxor.u32 %v642, 2147516416
    %v651 = vxor.u32 %v643, 2147516416
    %v653 = vmul.bf16 %v648, 1069105081
    %v654 = vpow.bf16.pop %v653
    %v656 = vmul.bf16 %v649, 1069105081
    %v657 = vpow.bf16.pop %v656
    %v659 = vmul.bf16 %v650, 1069105081
    %v660 = vpow.bf16.pop %v659
    %v662 = vmul.bf16 %v651, 1069105081
    %v663 = vpow.bf16.pop %v662
    %v664 = vadd.bf16 %v654, 1065369472
    %v665 = vadd.bf16 %v657, 1065369472
    %v666 = vadd.bf16 %v660, 1065369472
    %v667 = vadd.bf16 %v663, 1065369472
    %v668 = vrcp.bf16.pop %v664
    %v669 = vmul.bf16 1065369472, %v668
    %v670 = vrcp.bf16.pop %v665
    %v671 = vmul.bf16 1065369472, %v670
    %v672 = vrcp.bf16.pop %v666
    %v673 = vmul.bf16 1065369472, %v672
    %v674 = vrcp.bf16.pop %v667
    %v675 = vmul.bf16 1065369472, %v674
    %v676 = vmul.bf16 %v640, %v669
    %v677 = vmul.bf16 %v641, %v671
    %v678 = vmul.bf16 %v642, %v673
    %v679 = vmul.bf16 %v643, %v675
    %v680 = vmul.bf16 %v676, %v644
    %v681 = vmul.bf16 %v677, %v645
    %v682 = vmul.bf16 %v678, %v646
    %v683 = vmul.bf16 %v679, %v647
    %v684 = vld [vmem:[#allocation2] sm:$0xff]
    %v685 = vld [vmem:[#allocation2 + $0x8] sm:$0xff]
    %v686 = vld [vmem:[#allocation9] sm:$0xf]
    %v687 = vld [vmem:[#allocation9 + $0x4] sm:$0xf]
    %v688 = vld [vmem:[#allocation9 + $0x8] sm:$0xf]
    %v689 = vld [vmem:[#allocation9 + $0xc] sm:$0xf]
    %v690 = vld [vmem:[#allocation9 + $0x10] sm:$0xf]
    %v691 = vld [vmem:[#allocation9 + $0x14] sm:$0xf]
    %v692 = vld [vmem:[#allocation9 + $0x18] sm:$0xf]
    %v693 = vld [vmem:[#allocation9 + $0x1c] sm:$0xf]
    %v694 = vld [vmem:[#allocation9 + $0x20] sm:$0xf]
    %v695 = vld [vmem:[#allocation9 + $0x24] sm:$0xf]
    %v696 = vld [vmem:[#allocation9 + $0x28] sm:$0xf]
    %v697 = vld [vmem:[#allocation9 + $0x2c] sm:$0xf]
    %v698 = vld [vmem:[#allocation9 + $0x30] sm:$0xf]
    %v699 = vld [vmem:[#allocation9 + $0x34] sm:$0xf]
    %v700 = vld [vmem:[#allocation9 + $0x38] sm:$0xf]
    %v701 = vld [vmem:[#allocation9 + $0x3c] sm:$0xf]
    %v702 = vld [vmem:[#allocation9 + $0x40] sm:$0xf]
    %v703 = vld [vmem:[#allocation9 + $0x44] sm:$0xf]
    %v704 = vld [vmem:[#allocation9 + $0x48] sm:$0xf]
    %v705 = vld [vmem:[#allocation9 + $0x4c] sm:$0xf]
    %v706 = vld [vmem:[#allocation9 + $0x50] sm:$0xf]
    %v707 = vld [vmem:[#allocation9 + $0x54] sm:$0xf]
    %v708 = vld [vmem:[#allocation9 + $0x58] sm:$0xf]
    %v709 = vld [vmem:[#allocation9 + $0x5c] sm:$0xf]
    %v710 = vld [vmem:[#allocation9 + $0x60] sm:$0xf]
    %v711 = vld [vmem:[#allocation9 + $0x64] sm:$0xf]
    %v712 = vld [vmem:[#allocation9 + $0x68] sm:$0xf]
    %v713 = vld [vmem:[#allocation9 + $0x6c] sm:$0xf]
    %v714 = vld [vmem:[#allocation9 + $0x70] sm:$0xf]
    %v715 = vld [vmem:[#allocation9 + $0x74] sm:$0xf]
    %v716 = vld [vmem:[#allocation9 + $0x78] sm:$0xf]
    %v717 = vld [vmem:[#allocation9 + $0x7c] sm:$0xf]
    %v718 = vld [vmem:[#allocation9 + $0x80] sm:$0xf]
    %v719 = vld [vmem:[#allocation9 + $0x84] sm:$0xf]
    %v720 = vld [vmem:[#allocation9 + $0x88] sm:$0xf]
    %v721 = vld [vmem:[#allocation9 + $0x8c] sm:$0xf]
    %v722 = vld [vmem:[#allocation9 + $0x90] sm:$0xf]
    %v723 = vld [vmem:[#allocation9 + $0x94] sm:$0xf]
    %v724 = vld [vmem:[#allocation9 + $0x98] sm:$0xf]
    %v725 = vld [vmem:[#allocation9 + $0x9c] sm:$0xf]
    %v726 = vld [vmem:[#allocation9 + $0xa0] sm:$0xf]
    %v727 = vld [vmem:[#allocation9 + $0xa4] sm:$0xf]
    %v728 = vld [vmem:[#allocation9 + $0xa8] sm:$0xf]
    %v729 = vld [vmem:[#allocation9 + $0xac] sm:$0xf]
    %v730 = vld [vmem:[#allocation9 + $0xb0] sm:$0xf]
    %v731 = vld [vmem:[#allocation9 + $0xb4] sm:$0xf]
    %v732 = vld [vmem:[#allocation9 + $0xb8] sm:$0xf]
    %v733 = vld [vmem:[#allocation9 + $0xbc] sm:$0xf]
    %v734 = vld [vmem:[#allocation9 + $0xc0] sm:$0xf]
    %v735 = vld [vmem:[#allocation9 + $0xc4] sm:$0xf]
    %v736 = vld [vmem:[#allocation9 + $0xc8] sm:$0xf]
    %v737 = vld [vmem:[#allocation9 + $0xcc] sm:$0xf]
    %v738 = vld [vmem:[#allocation9 + $0xd0] sm:$0xf]
    %v739 = vld [vmem:[#allocation9 + $0xd4] sm:$0xf]
    %v740 = vld [vmem:[#allocation9 + $0xd8] sm:$0xf]
    %v741 = vld [vmem:[#allocation9 + $0xdc] sm:$0xf]
    %v742 = vld [vmem:[#allocation9 + $0xe0] sm:$0xf]
    %v743 = vld [vmem:[#allocation9 + $0xe4] sm:$0xf]
    %v744 = vld [vmem:[#allocation9 + $0xe8] sm:$0xf]
    %v745 = vld [vmem:[#allocation9 + $0xec] sm:$0xf]
    %v746 = vld [vmem:[#allocation9 + $0xf0] sm:$0xf]
    %v747 = vld [vmem:[#allocation9 + $0xf4] sm:$0xf]
    %v748 = vld [vmem:[#allocation9 + $0xf8] sm:$0xf]
    %v749 = vld [vmem:[#allocation9 + $0xfc] sm:$0xf]
    %v814 = vunpack.c.l.b16 %v686
    %v815 = vunpack.c.l.b16 %v687
    %v816 = vunpack.c.l.b16 %v688
    %v817 = vunpack.c.l.b16 %v689
    %v818 = vunpack.c.l.b16 %v690
    %v819 = vunpack.c.l.b16 %v691
    %v820 = vunpack.c.l.b16 %v692
    %v821 = vunpack.c.l.b16 %v693
    %v822 = vunpack.c.l.b16 %v694
    %v823 = vunpack.c.l.b16 %v695
    %v824 = vunpack.c.l.b16 %v696
    %v825 = vunpack.c.l.b16 %v697
    %v826 = vunpack.c.l.b16 %v698
    %v827 = vunpack.c.l.b16 %v699
    %v828 = vunpack.c.l.b16 %v700
    %v829 = vunpack.c.l.b16 %v701
    %v830 = vunpack.c.l.b16 %v702
    %v831 = vunpack.c.l.b16 %v703
    %v832 = vunpack.c.l.b16 %v704
    %v833 = vunpack.c.l.b16 %v705
    %v834 = vunpack.c.l.b16 %v706
    %v835 = vunpack.c.l.b16 %v707
    %v836 = vunpack.c.l.b16 %v708
    %v837 = vunpack.c.l.b16 %v709
    %v838 = vunpack.c.l.b16 %v710
    %v839 = vunpack.c.l.b16 %v711
    %v840 = vunpack.c.l.b16 %v712
    %v841 = vunpack.c.l.b16 %v713
    %v842 = vunpack.c.l.b16 %v714
    %v843 = vunpack.c.l.b16 %v715
    %v844 = vunpack.c.l.b16 %v716
    %v845 = vunpack.c.l.b16 %v717
    %v846 = vunpack.c.l.b16 %v718
    %v847 = vunpack.c.l.b16 %v719
    %v848 = vunpack.c.l.b16 %v720
    %v849 = vunpack.c.l.b16 %v721
    %v850 = vunpack.c.l.b16 %v722
    %v851 = vunpack.c.l.b16 %v723
    %v852 = vunpack.c.l.b16 %v724
    %v853 = vunpack.c.l.b16 %v725
    %v854 = vunpack.c.l.b16 %v726
    %v855 = vunpack.c.l.b16 %v727
    %v856 = vunpack.c.l.b16 %v728
    %v857 = vunpack.c.l.b16 %v729
    %v858 = vunpack.c.l.b16 %v730
    %v859 = vunpack.c.l.b16 %v731
    %v860 = vunpack.c.l.b16 %v732
    %v861 = vunpack.c.l.b16 %v733
    %v862 = vunpack.c.l.b16 %v734
    %v863 = vunpack.c.l.b16 %v735
    %v864 = vunpack.c.l.b16 %v736
    %v865 = vunpack.c.l.b16 %v737
    %v866 = vunpack.c.l.b16 %v738
    %v867 = vunpack.c.l.b16 %v739
    %v868 = vunpack.c.l.b16 %v740
    %v869 = vunpack.c.l.b16 %v741
    %v870 = vunpack.c.l.b16 %v742
    %v871 = vunpack.c.l.b16 %v743
    %v872 = vunpack.c.l.b16 %v744
    %v873 = vunpack.c.l.b16 %v745
    %v874 = vunpack.c.l.b16 %v746
    %v875 = vunpack.c.l.b16 %v747
    %v876 = vunpack.c.l.b16 %v748
    %v877 = vunpack.c.l.b16 %v749
    %v878 = vpack.c.b16 %v815, %v814
    %v879 = vpack.c.b16 %v817, %v816
    %v880 = vpack.c.b16 %v819, %v818
    %v881 = vpack.c.b16 %v821, %v820
    %v882 = vpack.c.b16 %v823, %v822
    %v883 = vpack.c.b16 %v825, %v824
    %v884 = vpack.c.b16 %v827, %v826
    %v885 = vpack.c.b16 %v829, %v828
    %v886 = vpack.c.b16 %v831, %v830
    %v887 = vpack.c.b16 %v833, %v832
    %v888 = vpack.c.b16 %v835, %v834
    %v889 = vpack.c.b16 %v837, %v836
    %v890 = vpack.c.b16 %v839, %v838
    %v891 = vpack.c.b16 %v841, %v840
    %v892 = vpack.c.b16 %v843, %v842
    %v893 = vpack.c.b16 %v845, %v844
    %v894 = vpack.c.b16 %v847, %v846
    %v895 = vpack.c.b16 %v849, %v848
    %v896 = vpack.c.b16 %v851, %v850
    %v897 = vpack.c.b16 %v853, %v852
    %v898 = vpack.c.b16 %v855, %v854
    %v899 = vpack.c.b16 %v857, %v856
    %v900 = vpack.c.b16 %v859, %v858
    %v901 = vpack.c.b16 %v861, %v860
    %v902 = vpack.c.b16 %v863, %v862
    %v903 = vpack.c.b16 %v865, %v864
    %v904 = vpack.c.b16 %v867, %v866
    %v905 = vpack.c.b16 %v869, %v868
    %v906 = vpack.c.b16 %v871, %v870
    %v907 = vpack.c.b16 %v873, %v872
    %v908 = vpack.c.b16 %v875, %v874
    %v909 = vpack.c.b16 %v877, %v876
    %942 = vmatprep.subr.bf16.mxu0 0
    %943 = vmatpush1.bf16.msra.mxu0 %v878
    %944 = vmatprep.subr.bf16.mxu0 0
    %945 = vmatpush1.bf16.msra.mxu0 %v879
    %946 = vmatprep.subr.bf16.mxu0 0
    %947 = vmatpush1.bf16.msra.mxu0 %v880
    %948 = vmatprep.subr.bf16.mxu0 0
    %949 = vmatpush1.bf16.msra.mxu0 %v881
    %950 = vmatprep.subr.bf16.mxu0 0
    %951 = vmatpush1.bf16.msra.mxu0 %v882
    %952 = vmatprep.subr.bf16.mxu0 0
    %953 = vmatpush1.bf16.msra.mxu0 %v883
    %954 = vmatprep.subr.bf16.mxu0 0
    %955 = vmatpush1.bf16.msra.mxu0 %v884
    %956 = vmatprep.subr.bf16.mxu0 0
    %957 = vmatpush1.bf16.msra.mxu0 %v885
    %958 = vmatprep.subr.bf16.mxu0 0
    %959 = vmatpush1.bf16.msra.mxu0 %v886
    %960 = vmatprep.subr.bf16.mxu0 0
    %961 = vmatpush1.bf16.msra.mxu0 %v887
    %962 = vmatprep.subr.bf16.mxu0 0
    %963 = vmatpush1.bf16.msra.mxu0 %v888
    %964 = vmatprep.subr.bf16.mxu0 0
    %965 = vmatpush1.bf16.msra.mxu0 %v889
    %966 = vmatprep.subr.bf16.mxu0 0
    %967 = vmatpush1.bf16.msra.mxu0 %v890
    %968 = vmatprep.subr.bf16.mxu0 0
    %969 = vmatpush1.bf16.msra.mxu0 %v891
    %970 = vmatprep.subr.bf16.mxu0 0
    %971 = vmatpush1.bf16.msra.mxu0 %v892
    %972 = vmatprep.subr.bf16.mxu0 0
    %973 = vmatpush1.bf16.msra.mxu0 %v893
    %974 = vmatprep.mubr.bf16.mxu0 %v681
    %975 = vmatmul.mubr.bf16.gmra.mrb[0].mxu0 %v680
    %v976 = vpop.f32.mrb[0].mxu0
    %v977 = vadd.f32 0.0, %v976
    %v978 = vpop.f32.mrb[0].mxu0
    %v979 = vpop.f32.mrb[0].mxu0
    %v980 = vadd.f32 0.0, %v979
    %v981 = vpop.f32.mrb[0].mxu0
    %982 = vdwg.mxu0
    %983 = vmatprep.subr.bf16.mxu0 0
    %984 = vmatpush1.bf16.msra.mxu0 %v894
    %985 = vmatprep.subr.bf16.mxu0 0
    %986 = vmatpush1.bf16.msra.mxu0 %v895
    %987 = vmatprep.subr.bf16.mxu0 0
    %988 = vmatpush1.bf16.msra.mxu0 %v896
    %989 = vmatprep.subr.bf16.mxu0 0
    %990 = vmatpush1.bf16.msra.mxu0 %v897
    %991 = vmatprep.subr.bf16.mxu0 0
    %992 = vmatpush1.bf16.msra.mxu0 %v898
    %993 = vmatprep.subr.bf16.mxu0 0
    %994 = vmatpush1.bf16.msra.mxu0 %v899
    %995 = vmatprep.subr.bf16.mxu0 0
    %996 = vmatpush1.bf16.msra.mxu0 %v900
    %997 = vmatprep.subr.bf16.mxu0 0
    %998 = vmatpush1.bf16.msra.mxu0 %v901
    %999 = vmatprep.subr.bf16.mxu0 0
    %1000 = vmatpush1.bf16.msra.mxu0 %v902
    %1001 = vmatprep.subr.bf16.mxu0 0
    %1002 = vmatpush1.bf16.msra.mxu0 %v903
    %1003 = vmatprep.subr.bf16.mxu0 0
    %1004 = vmatpush1.bf16.msra.mxu0 %v904
    %1005 = vmatprep.subr.bf16.mxu0 0
    %1006 = vmatpush1.bf16.msra.mxu0 %v905
    %1007 = vmatprep.subr.bf16.mxu0 0
    %1008 = vmatpush1.bf16.msra.mxu0 %v906
    %1009 = vmatprep.subr.bf16.mxu0 0
    %1010 = vmatpush1.bf16.msra.mxu0 %v907
    %1011 = vmatprep.subr.bf16.mxu0 0
    %1012 = vmatpush1.bf16.msra.mxu0 %v908
    %1013 = vmatprep.subr.bf16.mxu0 0
    %1014 = vmatpush1.bf16.msra.mxu0 %v909
    %1015 = vmatprep.mubr.bf16.mxu0 %v683
    %1016 = vmatmul.mubr.bf16.gmra.mrb[0].mxu0 %v682
    %v1017 = vpop.f32.mrb[0].mxu0
    %v1018 = vadd.f32 %v977, %v1017
    %v1019 = vpop.f32.mrb[0].mxu0
    %v1020 = vpop.f32.mrb[0].mxu0
    %v1021 = vadd.f32 %v980, %v1020
    %v1022 = vpop.f32.mrb[0].mxu0
    %1023 = vdwg.mxu0
    %v1024 = vadd.f32 %v684, %v1018
    %v1025 = vadd.f32 %v685, %v1021
    %1026 = vst [vmem:[#allocation2] sm:$0xff] %v1024
    %1027 = vst [vmem:[#allocation2 + $0x8] sm:$0xff] %v1025
    // Predicated region
    $region38: #{tpu_custom_call.1} parent=1 // pred_check
      %p1028 = pneg %p75
    $region39: #{tpu_custom_call.1} parent=1 // pred_check_branch
      %1030 = sbr.rel (%p1028) target = $region41
    $region40: #{tpu_custom_call.1} parent=1 // pred_region
      %v1031 = vld [vmem:[#allocation2] sm:$0xff]
      %v1032 = vld [vmem:[#allocation2 + $0x8] sm:$0xff]
      %1033 = vst [vmem:[#allocation11] sm:$0xff] %v1031
      %1034 = vst [vmem:[#allocation11 + $0x8] sm:$0xff] %v1032
    $region41: #{tpu_custom_call.1} parent=1 // pred_fallthru
      _
    // Predicated region
    $region42: #{tpu_custom_call.1} parent=1 // pred_check
      _
    $region43: #{tpu_custom_call.1} parent=1 // pred_check_branch
      %1036 = sbr.rel (0) target = $region45
    $region44: #{tpu_custom_call.1} parent=1 // pred_region
      %s1038 = ssub.s32 256, 256
      %1039 = vsyncadd [#allocation5], %s1038
      %s1040 = sshll.u32 [#allocation11], 4
      %s1041 = int_to_ptr.vmem [resolvable:$true] %s1040
      %1046 = dma.vmem_to_hbm [thread:$0]  %s1041, 256, %s4, [#allocation5], 128, 128, 8
    $region45: #{tpu_custom_call.1} parent=1 // pred_fallthru
      _
    // Predicated region
    $region46: #{tpu_custom_call.1} parent=1 // pred_check
      _
    $region47: #{tpu_custom_call.1} parent=1 // pred_check_branch
      %1048 = sbr.rel (0) target = $region49
    $region48: #{tpu_custom_call.1} parent=1 // pred_region
      %1049 = dma.done [#allocation5], 256
    $region49: #{tpu_custom_call.1} parent=1 // pred_fallthru
      _
    %1050 = vsyncpa [#allocation4], 1
    %1051 = vsyncpa [#allocation7], 1
    %1052 = vsyncpa [#allocation10], 1
    %1053 = vsyncpa [#allocation5], 1

</llo_original>
